<compile_context>
chip_gen: v7x
topology: tpu7x:2x2x1
jax: 0.10.0
libtpu: 0.0.40
codegen_flags: <defaults>
</compile_context>

<pallas_src>
import functools

import jax
import jax.numpy as jnp
from jax import lax
from jax.experimental import pallas as pl
from jax.experimental.pallas import tpu as pltpu


def _sdpa_kernel(q_ref, k_ref, v_ref, ctx_ref, attn_ref, *, scale, precision):
    # One (batch, Lq-tile) per grid step; blocks carry a leading size-1 batch dim.
    q = q_ref[0]  # (TQ, D)
    k = k_ref[0]  # (Lk, D)
    v = v_ref[0]  # (Lk, Dv)

    # Matches PyTorch `if scale:` truthiness (None or 0.0 -> no scaling).
    # Folding the scale into q costs TQ*D VALU multiplies instead of TQ*Lk.
    if scale:
        q = q * scale

    # scores = q @ k^T, expressed as a direct contraction over the feature dim
    # (no in-kernel transpose / relayout of the resident K tile).
    scores = lax.dot_general(
        q, k,
        dimension_numbers=(((1,), (1,)), ((), ())),
        preferred_element_type=jnp.float32,
        precision=precision,
    )  # (TQ, Lk), f32

    # Numerically-stable softmax over the last axis (== dim=2 of [B, Lq, Lk]).
    m = jnp.max(scores, axis=-1, keepdims=True)
    e = jnp.exp(scores - m)
    denom = jnp.sum(e, axis=-1, keepdims=True)
    # Exact per-row reciprocal: the attention matrix is a returned tensor and
    # must match softmax closely (approx EUP reciprocal drifted past tolerance).
    attn = e * (1.0 / denom)

    # dropout(p=0.0) is identity.
    # TODO(synk): stochastic dropout via pltpu.prng_* if attention_dropout > 0.

    # Single cast: p feeds the PV matmul (bf16 MXU path for bf16 inputs) and,
    # when dtypes agree (the common case), the attention store as well.
    p = attn.astype(v.dtype)
    ctx = jnp.dot(p, v, preferred_element_type=jnp.float32, precision=precision)

    attn_ref[0] = p if p.dtype == attn_ref.dtype else attn.astype(attn_ref.dtype)
    ctx_ref[0] = ctx.astype(ctx_ref.dtype)


def _vmem_limit_bytes():
    """Per-generation scoped-VMEM budget (v7x only has 64 MiB physical)."""
    try:
        cap = int(pltpu.get_tpu_info().vmem_capacity_bytes)
    except Exception:
        cap = 64 * 1024 * 1024  # conservative (v7x-sized) fallback
    if cap >= 128 * 1024 * 1024:
        return 96 * 1024 * 1024   # v5e / v6e: 128 MiB physical
    return 40 * 1024 * 1024       # v7x: 64 MiB physical, leave headroom


def _pick_q_tile(lq, lk, d, dv, in_itemsize, attn_itemsize, vmem_budget):
    """Largest MXU-friendly TQ whose per-step working set fits the VMEM budget."""
    # TQ-independent resident cost: double-buffered K and V blocks.
    fixed = 2 * lk * (d + dv) * in_itemsize
    avail = max(vmem_budget - fixed, 0)
    # Per-query-row cost: double-buffered q / ctx / attn blocks plus the f32
    # softmax working set (~4 live copies of a (TQ, Lk) f32 tile).
    per_row = (2 * d * in_itemsize          # q blocks
               + 2 * dv * in_itemsize       # ctx blocks
               + 2 * lk * attn_itemsize     # attn blocks
               + 4 * lk * 4)                # f32 scores/exp/attn working set
    for tq in (512, 256, 128, 64, 32, 16, 8):
        if tq > max(lq, 8):
            continue
        if tq * per_row <= avail:
            return tq
    # Even TQ=8 does not fit: K/V residency is the binding constraint.
    # TODO(synk): stream K/V in Lk chunks with a deferred-normalization softmax
    # for very long sequences (needed on v7x when Lk*(D+Dv) alone is too big).
    return 8


def scaled_dot_product_attention(q, k, v, scale=None, attn_dtype=None,
                                 precision=lax.Precision.HIGHEST):
    """Returns (context [B, Lq, Dv], attention [B, Lq, Lk])."""
    B, Lq, D = q.shape
    Bk, Lk, Dk = k.shape
    Bv, Lv, Dv = v.shape
    assert B == Bk == Bv and D == Dk and Lk == Lv

    attn_dtype = q.dtype if attn_dtype is None else jnp.dtype(attn_dtype)
    in_itemsize = jnp.dtype(q.dtype).itemsize
    attn_itemsize = jnp.dtype(attn_dtype).itemsize

    vmem_limit = _vmem_limit_bytes()
    # Leave headroom for compiler internal scratch / spill when sizing TQ.
    TQ = _pick_q_tile(Lq, Lk, D, Dv, in_itemsize, attn_itemsize,
                      (3 * vmem_limit) // 4)
    num_q_tiles = pl.cdiv(Lq, TQ)  # ragged Lq handled by a padded last tile

    kernel = functools.partial(_sdpa_kernel, scale=scale, precision=precision)

    out_shapes = (
        jax.ShapeDtypeStruct((B, Lq, Dv), q.dtype),       # context
        jax.ShapeDtypeStruct((B, Lq, Lk), attn_dtype),    # attention
    )

    cost = pl.CostEstimate(
        flops=2 * B * Lq * Lk * (D + Dv),
        transcendentals=B * Lq * Lk,
        bytes_accessed=((q.size + k.size + v.size) * in_itemsize
                        + B * Lq * Dv * in_itemsize
                        + B * Lq * Lk * attn_itemsize),
    )

    return pl.pallas_call(
        kernel,
        out_shape=out_shapes,
        grid_spec=pltpu.PrefetchScalarGridSpec(
            num_scalar_prefetch=0,
            grid=(B, num_q_tiles),
            in_specs=[
                pl.BlockSpec((1, TQ, D), lambda b, i: (b, i, 0)),
                # K and V revisit the same block across the Lq-tile axis, so
                # Pallas skips the re-DMA on inner-axis steps.
                # TODO(synk): pipeline_mode=pl.Buffered(1) to single-buffer K/V
                # once buffer_count=1 is verified on all target runtimes.
                pl.BlockSpec((1, Lk, D), lambda b, i: (b, 0, 0)),
                pl.BlockSpec((1, Lk, Dv), lambda b, i: (b, 0, 0)),
            ],
            out_specs=[
                pl.BlockSpec((1, TQ, Dv), lambda b, i: (b, i, 0)),
                pl.BlockSpec((1, TQ, Lk), lambda b, i: (b, i, 0)),
            ],
        ),
        compiler_params=pltpu.CompilerParams(
            # Both axes are independent -> megacore can shard over Lq tiles
            # even when B is small (v7x has 2 TensorCores).
            dimension_semantics=("parallel", "parallel"),
            vmem_limit_bytes=vmem_limit,
        ),
        cost_estimate=cost,
    )(q, k, v)


def _reference(q, k, v, scale=None):
    scores = jnp.einsum("bqd,bkd->bqk", q, k,
                        precision=lax.Precision.HIGHEST).astype(jnp.float32)
    if scale:
        scores = scores * scale
    attn = jax.nn.softmax(scores, axis=2)
    ctx = jnp.einsum("bqk,bkd->bqd", attn.astype(v.dtype), v,
                     precision=lax.Precision.HIGHEST)
    return ctx.astype(q.dtype), attn.astype(q.dtype)


if __name__ == "__main__":
    key = jax.random.PRNGKey(0)
    B, Lq, Lk, D, Dv = 2, 8, 8, 32, 32
    kq, kk, kv = jax.random.split(key, 3)
    q = jax.random.normal(kq, (B, Lq, D), dtype=jnp.float32)
    k = jax.random.normal(kk, (B, Lk, D), dtype=jnp.float32)
    v = jax.random.normal(kv, (B, Lk, Dv), dtype=jnp.float32)
    scale = 1.0 / (D ** 0.5)

    ctx, attn = scaled_dot_product_attention(q, k, v, scale=scale)
    jax.block_until_ready((ctx, attn))

    ctx_ref, attn_ref = _reference(q, k, v, scale=scale)
    assert jnp.allclose(ctx, ctx_ref, atol=1e-3, rtol=1e-3)
    assert jnp.allclose(attn, attn_ref, atol=1e-3, rtol=1e-3)

    print("KERNEL_OK")
</pallas_src>

<mosaic_0001>
module attributes {stable_mosaic.version = 11 : i64} {
  func.func @_sdpa_kernel(%arg0: i32, %arg1: i32, %arg2: memref<1x8x32xf32, #tpu.memory_space<vmem>>, %arg3: memref<1x8x32xf32, #tpu.memory_space<vmem>>, %arg4: memref<1x8x32xf32, #tpu.memory_space<vmem>>, %arg5: memref<1x8x32xf32, #tpu.memory_space<vmem>>, %arg6: memref<1x8x8xf32, #tpu.memory_space<vmem>>) attributes {dimension_semantics = [#tpu.dimension_semantics<parallel>, #tpu.dimension_semantics<parallel>], iteration_bounds = array<i64: 2, 1>, scalar_prefetch = 0 : i64, scratch_operands = 0 : i64, tpu.core_type = #tpu.core_type<tc>, window_params = [{transform_indices = @transform_0, window_bounds = array<i64: 1, 8, 32>}, {transform_indices = @transform_1, window_bounds = array<i64: 1, 8, 32>}, {transform_indices = @transform_2, window_bounds = array<i64: 1, 8, 32>}, {transform_indices = @transform_3, window_bounds = array<i64: 1, 8, 32>}, {transform_indices = @transform_4, window_bounds = array<i64: 1, 8, 8>}]} {
    %c0 = arith.constant 0 : index
    %c0_0 = arith.constant 0 : index
    %c0_1 = arith.constant 0 : index
    %0 = vector.load %arg2[%c0, %c0_0, %c0_1] : memref<1x8x32xf32, #tpu.memory_space<vmem>>, vector<1x8x32xf32>
    %1 = vector.shape_cast %0 : vector<1x8x32xf32> to vector<8x32xf32>
    %c0_2 = arith.constant 0 : index
    %c0_3 = arith.constant 0 : index
    %c0_4 = arith.constant 0 : index
    %2 = vector.load %arg3[%c0_2, %c0_3, %c0_4] : memref<1x8x32xf32, #tpu.memory_space<vmem>>, vector<1x8x32xf32>
    %3 = vector.shape_cast %2 : vector<1x8x32xf32> to vector<8x32xf32>
    %c0_5 = arith.constant 0 : index
    %c0_6 = arith.constant 0 : index
    %c0_7 = arith.constant 0 : index
    %4 = vector.load %arg4[%c0_5, %c0_6, %c0_7] : memref<1x8x32xf32, #tpu.memory_space<vmem>>, vector<1x8x32xf32>
    %5 = vector.shape_cast %4 : vector<1x8x32xf32> to vector<8x32xf32>
    %cst = arith.constant 0.176776692 : f32
    %6 = vector.broadcast %cst : f32 to vector<8x32xf32>
    %7 = arith.mulf %1, %6 : vector<8x32xf32>
    %cst_8 = arith.constant dense<0.000000e+00> : vector<8x8xf32>
    %8 = tpu.matmul %7, %3, %cst_8 {dimension_numbers = #tpu.dot_dimension_numbers<[1], [1], [0], [0], [0, 0, 1, 0], [], []>, precision = #tpu.contract_precision<fp32>} : vector<8x32xf32>, vector<8x32xf32>, vector<8x8xf32> -> vector<8x8xf32>
    %cst_9 = arith.constant dense<0xFF800000> : vector<8xf32>
    %9 = vector.multi_reduction <maximumf>, %8, %cst_9 [1] : vector<8x8xf32> to vector<8xf32>
    %10 = vector.shape_cast %9 : vector<8xf32> to vector<8x1xf32>
    %11 = vector.broadcast %10 : vector<8x1xf32> to vector<8x8xf32>
    %12 = arith.subf %8, %11 : vector<8x8xf32>
    %13 = math.exp %12 : vector<8x8xf32>
    %cst_10 = arith.constant dense<0.000000e+00> : vector<8xf32>
    %14 = vector.multi_reduction <add>, %13, %cst_10 [1] : vector<8x8xf32> to vector<8xf32>
    %15 = vector.shape_cast %14 : vector<8xf32> to vector<8x1xf32>
    %cst_11 = arith.constant 1.000000e+00 : f32
    %16 = vector.broadcast %cst_11 : f32 to vector<8x1xf32>
    %17 = arith.divf %16, %15 : vector<8x1xf32>
    %18 = vector.broadcast %17 : vector<8x1xf32> to vector<8x8xf32>
    %19 = arith.mulf %13, %18 : vector<8x8xf32>
    %cst_12 = arith.constant dense<0.000000e+00> : vector<8x32xf32>
    %20 = tpu.matmul %19, %5, %cst_12 {dimension_numbers = #tpu.dot_dimension_numbers<[1], [0], [0], [1], [0, 0, 1, 1], [], []>, precision = #tpu.contract_precision<fp32>} : vector<8x8xf32>, vector<8x32xf32>, vector<8x32xf32> -> vector<8x32xf32>
    %c0_13 = arith.constant 0 : index
    %c0_14 = arith.constant 0 : index
    %c0_15 = arith.constant 0 : index
    %21 = vector.load %arg6[%c0_13, %c0_14, %c0_15] : memref<1x8x8xf32, #tpu.memory_space<vmem>>, vector<1x8x8xf32>
    %22 = vector.shape_cast %21 : vector<1x8x8xf32> to vector<8x8xf32>
    %23 = vector.shape_cast %19 : vector<8x8xf32> to vector<1x8x8xf32>
    tpu.vector_store %arg6[%c0_13, %c0_14, %c0_15], %23 {strides = array<i32>} : memref<1x8x8xf32, #tpu.memory_space<vmem>>, vector<1x8x8xf32>,
    %c0_16 = arith.constant 0 : index
    %c0_17 = arith.constant 0 : index
    %c0_18 = arith.constant 0 : index
    %24 = vector.load %arg5[%c0_16, %c0_17, %c0_18] : memref<1x8x32xf32, #tpu.memory_space<vmem>>, vector<1x8x32xf32>
    %25 = vector.shape_cast %24 : vector<1x8x32xf32> to vector<8x32xf32>
    %26 = vector.shape_cast %20 : vector<8x32xf32> to vector<1x8x32xf32>
    tpu.vector_store %arg5[%c0_16, %c0_17, %c0_18], %26 {strides = array<i32>} : memref<1x8x32xf32, #tpu.memory_space<vmem>>, vector<1x8x32xf32>,
    return
  }
  func.func @transform_0(%arg0: i32, %arg1: i32) -> (i32, i32, i32) {
    %c0_i32 = arith.constant 0 : i32
    %c0_i32_0 = arith.constant 0 : i32
    return %arg0, %arg1, %c0_i32 : i32, i32, i32
  }
  func.func @transform_1(%arg0: i32, %arg1: i32) -> (i32, i32, i32) {
    %c0_i32 = arith.constant 0 : i32
    %c0_i32_0 = arith.constant 0 : i32
    %c0_i32_1 = arith.constant 0 : i32
    return %arg0, %c0_i32, %c0_i32_0 : i32, i32, i32
  }
  func.func @transform_2(%arg0: i32, %arg1: i32) -> (i32, i32, i32) {
    %c0_i32 = arith.constant 0 : i32
    %c0_i32_0 = arith.constant 0 : i32
    %c0_i32_1 = arith.constant 0 : i32
    return %arg0, %c0_i32, %c0_i32_0 : i32, i32, i32
  }
  func.func @transform_3(%arg0: i32, %arg1: i32) -> (i32, i32, i32) {
    %c0_i32 = arith.constant 0 : i32
    %c0_i32_0 = arith.constant 0 : i32
    return %arg0, %arg1, %c0_i32 : i32, i32, i32
  }
  func.func @transform_4(%arg0: i32, %arg1: i32) -> (i32, i32, i32) {
    %c0_i32 = arith.constant 0 : i32
    %c0_i32_0 = arith.constant 0 : i32
    return %arg0, %arg1, %c0_i32 : i32, i32, i32
  }
}

</mosaic_0001>

<llo_original>
// kernel: tpu_custom_call.1
$region0: #{tpu_custom_call.1}
  #allocation0 [shape = 'u32[]', space=smem, size = 0x4, offset = 0x4, fixed_abs, tag = 'smem constant byte address 0x4 - core index']
  #allocation1 [shape = 'u32[144,128]{1,0:T(1,128)}', space=vmem, size = 0x12000, scoped, tag = 'internal scratch']
  %s0 = inlined_call_operand.hbm [shape: f32[2,8,32], index: 0, kind: input, shape index: {}]
  %s1 = inlined_call_operand.hbm [shape: f32[2,8,32], index: 1, kind: input, shape index: {}]
  %s2 = inlined_call_operand.hbm [shape: f32[2,8,32], index: 2, kind: input, shape index: {}]
  %s3 = inlined_call_operand.hbm [shape: f32[2,8,32], index: 3, kind: output, shape index: {0}]
  %s4 = inlined_call_operand.hbm [shape: f32[2,8,8], index: 4, kind: output, shape index: {1}]
  %5 = xla_tuple %s3, %s4
  %s6 = sld [smem:[#allocation0]]
  $region65: #{tpu_custom_call.1} parent=0
    _
  %s8 = ssub.s32 1, %s6
  %s9 = scalar_select 0, %s8, %s6
  $region1: #{tpu_custom_call.1} parent=0
    #allocation2 [shape = 'u8[8192]{0}', space=vmem, size = 0x2000, scoped, tag = 'input window, operand 0']
    #allocation3 [shape = 's32[2]{0}', space=sflag, size = 0x8, scoped, tag = 'scoped memory for tpu_custom_call.1']
    #allocation4 [shape = 's32[2]{0}', space=sflag, size = 0x8, scoped, tag = 'scoped memory for tpu_custom_call.1']
    #allocation5 [shape = 'u8[8192]{0}', space=vmem, size = 0x2000, scoped, tag = 'input window, operand 1']
    #allocation6 [shape = 's32[2]{0}', space=sflag, size = 0x8, scoped, tag = 'scoped memory for tpu_custom_call.1']
    #allocation7 [shape = 'u8[8192]{0}', space=vmem, size = 0x2000, scoped, tag = 'input window, operand 2']
    #allocation8 [shape = 'u8[8192]{0}', space=vmem, size = 0x2000, scoped, tag = 'output window, operand 0']
    #allocation9 [shape = 'u8[8192]{0}', space=vmem, size = 0x2000, scoped, tag = 'output window, operand 1']
    #allocation10 [shape = 's32[2]{0}', space=sflag, size = 0x8, scoped, tag = 'scoped memory for tpu_custom_call.1']
    %10 = vsyncpa [#allocation3], 0
    %s11 = scalar_lea.sflag [#allocation3], 1
    %12 = vsyncpa %s11, 0
    %13 = vsyncpa [#allocation6], 0
    %s14 = scalar_lea.sflag [#allocation6], 1
    %15 = vsyncpa %s14, 0
    %16 = vsyncpa [#allocation4], 0
    %s17 = scalar_lea.sflag [#allocation4], 1
    %18 = vsyncpa %s17, 0
    %19 = vsyncpa [#allocation10], 0
    %s20 = scalar_lea.sflag [#allocation10], 1
    %21 = vsyncpa %s20, 0
    loop: start=0, step=1, limit=4
    $region2: #{tpu_custom_call.1} parent=1 // loop_pre_header
      _
    $region3: #{tpu_custom_call.1} parent=1 // loop_header
      %s23 = sphi 0, %s27
      %p24 = scmp.ge.s32.totalorder %s23, 4
      %s30 = sphi 0, %s42
      %s31 = sphi 0, %s38
      %s32 = sphi 0, %s30
      %s33 = sphi 0, %s31
      %s34 = sphi 0, %s32
      %s35 = sphi 0, %s33
      %s47 = sphi 0, %s49
      %s50 = sphi 0, %s47
      %s51 = sphi 0, %s50
      %s67 = sphi 0, %s51
      %s73 = sphi 0, %s75
      %s76 = sphi 0, %s73
      %s77 = sphi 0, %s76
      %s93 = sphi 0, %s77
      %s99 = sphi 0, %s101
      %s102 = sphi 0, %s99
      %s103 = sphi 0, %s102
      %s119 = sphi 0, %s103
      %s127 = sphi 0, %s129
      %s130 = sphi 0, %s127
      %s131 = sphi 0, %s130
      %s147 = sphi 0, %s131
      %s155 = sphi 0, %s157
      %s158 = sphi 0, %s155
      %s159 = sphi 0, %s158
      %s175 = sphi 0, %s159
    $region4: #{tpu_custom_call.1} parent=1 // loop_header_branch
      %26 = sbr.rel (%p24) target = $region8
    $region5: #{tpu_custom_call.1} parent=1 // loop_body
      %s28 = ssub.s32 %s23, 1
      %s29 = ssub.s32 %s23, 2
      %s36 = sadd.s32 1, %s31
      %p37 = scmp.ge.s32.totalorder %s36, 1
      %s38 = scalar_select %p37, 0, %s36
      %s39 = sadd.s32 1, %s30
      %s40 = scalar_select %p37, %s39, %s30
      %p41 = scmp.ge.s32.totalorder %s40, 2
      %s42 = scalar_select %p41, 0, %s40
      %s43 = ssub.s32 %s30, %s42
      %s44 = ssub.s32 %s31, %s38
      %s45 = sor.u32 %s43, %s44
      %p46 = scmp.eq.s32.totalorder %s45, 0
      %s48 = sadd.s32 %s47, 1
      %s49 = scalar_select %p46, %s47, %s48
      %p52 = pneg %p46
      %p53 = scmp.eq.s32.totalorder %s23, 1
      %p54 = por %p52, %p53
      %p55 = scmp.ne.s32.totalorder %s47, %s50
      %p56 = scmp.eq.s32.totalorder %s23, 0
      %p57 = por %p55, %p56
      %p58 = scmp.ne.s32.totalorder %s47, %s50
      %p59 = scmp.eq.s32.totalorder %s28, 1
      %p60 = por %p58, %p59
      %p61 = scmp.ne.s32.totalorder %s50, %s51
      %p62 = scmp.eq.s32.totalorder %s28, 0
      %p63 = por %p61, %p62
      %p64 = scmp.ne.s32.totalorder %s50, %s51
      %p65 = scmp.eq.s32.totalorder %s29, 1
      %p66 = por %p64, %p65
      %p68 = scmp.ne.s32.totalorder %s51, %s67
      %p69 = scmp.eq.s32.totalorder %s29, 0
      %p70 = por %p68, %p69
      %s71 = ssub.s32 %s30, %s42
      %p72 = scmp.eq.s32.totalorder %s71, 0
      %s74 = sadd.s32 %s73, 1
      %s75 = scalar_select %p72, %s73, %s74
      %p78 = pneg %p72
      %p79 = scmp.eq.s32.totalorder %s23, 1
      %p80 = por %p78, %p79
      %p81 = scmp.ne.s32.totalorder %s73, %s76
      %p82 = scmp.eq.s32.totalorder %s23, 0
      %p83 = por %p81, %p82
      %p84 = scmp.ne.s32.totalorder %s73, %s76
      %p85 = scmp.eq.s32.totalorder %s28, 1
      %p86 = por %p84, %p85
      %p87 = scmp.ne.s32.totalorder %s76, %s77
      %p88 = scmp.eq.s32.totalorder %s28, 0
      %p89 = por %p87, %p88
      %p90 = scmp.ne.s32.totalorder %s76, %s77
      %p91 = scmp.eq.s32.totalorder %s29, 1
      %p92 = por %p90, %p91
      %p94 = scmp.ne.s32.totalorder %s77, %s93
      %p95 = scmp.eq.s32.totalorder %s29, 0
      %p96 = por %p94, %p95
      %s97 = ssub.s32 %s30, %s42
      %p98 = scmp.eq.s32.totalorder %s97, 0
      %s100 = sadd.s32 %s99, 1
      %s101 = scalar_select %p98, %s99, %s100
      %p104 = pneg %p98
      %p105 = scmp.eq.s32.totalorder %s23, 1
      %p106 = por %p104, %p105
      %p107 = scmp.ne.s32.totalorder %s99, %s102
      %p108 = scmp.eq.s32.totalorder %s23, 0
      %p109 = por %p107, %p108
      %p110 = scmp.ne.s32.totalorder %s99, %s102
      %p111 = scmp.eq.s32.totalorder %s28, 1
      %p112 = por %p110, %p111
      %p113 = scmp.ne.s32.totalorder %s102, %s103
      %p114 = scmp.eq.s32.totalorder %s28, 0
      %p115 = por %p113, %p114
      %p116 = scmp.ne.s32.totalorder %s102, %s103
      %p117 = scmp.eq.s32.totalorder %s29, 1
      %p118 = por %p116, %p117
      %p120 = scmp.ne.s32.totalorder %s103, %s119
      %p121 = scmp.eq.s32.totalorder %s29, 0
      %p122 = por %p120, %p121
      %s123 = ssub.s32 %s30, %s42
      %s124 = ssub.s32 %s31, %s38
      %s125 = sor.u32 %s123, %s124
      %p126 = scmp.eq.s32.totalorder %s125, 0
      %s128 = sadd.s32 %s127, 1
      %s129 = scalar_select %p126, %s127, %s128
      %p132 = pneg %p126
      %p133 = scmp.eq.s32.totalorder %s23, 1
      %p134 = por %p132, %p133
      %p135 = scmp.ne.s32.totalorder %s127, %s130
      %p136 = scmp.eq.s32.totalorder %s23, 0
      %p137 = por %p135, %p136
      %p138 = scmp.ne.s32.totalorder %s127, %s130
      %p139 = scmp.eq.s32.totalorder %s28, 1
      %p140 = por %p138, %p139
      %p141 = scmp.ne.s32.totalorder %s130, %s131
      %p142 = scmp.eq.s32.totalorder %s28, 0
      %p143 = por %p141, %p142
      %p144 = scmp.ne.s32.totalorder %s130, %s131
      %p145 = scmp.eq.s32.totalorder %s29, 1
      %p146 = por %p144, %p145
      %p148 = scmp.ne.s32.totalorder %s131, %s147
      %p149 = scmp.eq.s32.totalorder %s29, 0
      %p150 = por %p148, %p149
      %s151 = ssub.s32 %s30, %s42
      %s152 = ssub.s32 %s31, %s38
      %s153 = sor.u32 %s151, %s152
      %p154 = scmp.eq.s32.totalorder %s153, 0
      %s156 = sadd.s32 %s155, 1
      %s157 = scalar_select %p154, %s155, %s156
      %p160 = pneg %p154
      %p161 = scmp.eq.s32.totalorder %s23, 1
      %p162 = por %p160, %p161
      %p163 = scmp.ne.s32.totalorder %s155, %s158
      %p164 = scmp.eq.s32.totalorder %s23, 0
      %p165 = por %p163, %p164
      %p166 = scmp.ne.s32.totalorder %s155, %s158
      %p167 = scmp.eq.s32.totalorder %s28, 1
      %p168 = por %p166, %p167
      %p169 = scmp.ne.s32.totalorder %s158, %s159
      %p170 = scmp.eq.s32.totalorder %s28, 0
      %p171 = por %p169, %p170
      %p172 = scmp.ne.s32.totalorder %s158, %s159
      %p173 = scmp.eq.s32.totalorder %s29, 1
      %p174 = por %p172, %p173
      %p176 = scmp.ne.s32.totalorder %s159, %s175
      %p177 = scmp.eq.s32.totalorder %s29, 0
      %p178 = por %p176, %p177
      %p179 = scmp.le.s32.totalorder 1, %s23
      %p180 = scmp.lt.s32.totalorder %s23, 3
      %p181 = pnand %p179, %p180
      %p182 = pneg %p181
      // Predicated region
      $region9: #{tpu_custom_call.1} parent=5 // pred_check
        _
      $region10: #{tpu_custom_call.1} parent=5 // pred_check_branch
        %184 = sbr.rel (%p181) target = $region12
      $region11: #{tpu_custom_call.1} parent=5 // pred_region
        %s185 = ssub.s32 %s23, 1
      $region12: #{tpu_custom_call.1} parent=5 // pred_fallthru
        _
      %p186 = scmp.lt.s32.totalorder %s23, 2
      // Predicated region
      $region13: #{tpu_custom_call.1} parent=5 // pred_check
        %p187 = pneg %p186
      $region14: #{tpu_custom_call.1} parent=5 // pred_check_branch
        %189 = sbr.rel (%p187) target = $region16
      $region15: #{tpu_custom_call.1} parent=5 // pred_region
        // Predicated region
        $region17: #{tpu_custom_call.1} parent=15 // pred_check
          %p190 = pneg %p57
        $region18: #{tpu_custom_call.1} parent=15 // pred_check_branch
          %192 = sbr.rel (%p190) target = $region20
        $region19: #{tpu_custom_call.1} parent=15 // pred_region
          %s193 = sand.u32 %s47, 1
          %s194 = scalar_lea.sflag [#allocation3], %s193
          %s195 = sand.u32 %s47, 1
          %s196 = smul.addr %s195, 8
          %s197 = scalar_lea.vmem [#allocation2], %s196
          %s199 = ssub.s32 128, 128
          %200 = vsyncadd %s194, %s199
          %s201 = sadd.s32 %s31, %s30
          %s202 = smul.addr %s201, 128
          %s203 = scalar_lea.hbm %s0, %s202
          %s205 = sshll.u32 %s197, 4
          %s206 = int_to_ptr.vmem [resolvable:$true] %s205
          %208 = dma.hbm_to_vmem [thread:$0]  %s203, 128, %s206, %s194
        $region20: #{tpu_custom_call.1} parent=15 // pred_fallthru
          _
        // Predicated region
        $region21: #{tpu_custom_call.1} parent=15 // pred_check
          %p209 = pneg %p83
        $region22: #{tpu_custom_call.1} parent=15 // pred_check_branch
          %211 = sbr.rel (%p209) target = $region24
        $region23: #{tpu_custom_call.1} parent=15 // pred_region
          %s212 = sand.u32 %s23, 1
          %s213 = scalar_lea.sflag [#allocation6], %s212
          %s214 = sand.u32 %s73, 1
          %s215 = smul.addr %s214, 8
          %s216 = scalar_lea.vmem [#allocation5], %s215
          %s218 = ssub.s32 128, 128
          %219 = vsyncadd %s213, %s218
          %s220 = smul.addr %s30, 128
          %s221 = scalar_lea.hbm %s1, %s220
          %s223 = sshll.u32 %s216, 4
          %s224 = int_to_ptr.vmem [resolvable:$true] %s223
          %226 = dma.hbm_to_vmem [thread:$0]  %s221, 128, %s224, %s213
        $region24: #{tpu_custom_call.1} parent=15 // pred_fallthru
          _
        // Predicated region
        $region25: #{tpu_custom_call.1} parent=15 // pred_check
          %p227 = pneg %p109
        $region26: #{tpu_custom_call.1} parent=15 // pred_check_branch
          %229 = sbr.rel (%p227) target = $region28
        $region27: #{tpu_custom_call.1} parent=15 // pred_region
          %s230 = sand.u32 %s23, 1
          %s231 = scalar_lea.sflag [#allocation6], %s230
          %s232 = sand.u32 %s99, 1
          %s233 = smul.addr %s232, 8
          %s234 = scalar_lea.vmem [#allocation7], %s233
          %s236 = ssub.s32 128, 128
          %237 = vsyncadd %s231, %s236
          %s238 = smul.addr %s30, 128
          %s239 = scalar_lea.hbm %s2, %s238
          %s241 = sshll.u32 %s234, 4
          %s242 = int_to_ptr.vmem [resolvable:$true] %s241
          %244 = dma.hbm_to_vmem [thread:$0]  %s239, 128, %s242, %s231
        $region28: #{tpu_custom_call.1} parent=15 // pred_fallthru
          _
      $region16: #{tpu_custom_call.1} parent=5 // pred_fallthru
        _
      %p245 = scmp.le.s32.totalorder 1, %s23
      %p246 = scmp.lt.s32.totalorder %s23, 3
      %p247 = pnand %p245, %p246
      %p248 = pneg %p247
      // Predicated region
      $region29: #{tpu_custom_call.1} parent=5 // pred_check
        _
      $region30: #{tpu_custom_call.1} parent=5 // pred_check_branch
        %250 = sbr.rel (%p247) target = $region32
      $region31: #{tpu_custom_call.1} parent=5 // pred_region
        %s251 = ssub.s32 %s23, 1
        %s252 = sand.u32 %s50, 1
        %s253 = scalar_lea.sflag [#allocation3], %s252
        %s254 = sand.u32 %s50, 1
        %s255 = smul.addr %s254, 8
        %s256 = scalar_lea.vmem [#allocation2], %s255
        // Predicated region
        $region33: #{tpu_custom_call.1} parent=31 // pred_check
          %p257 = pneg %p63
        $region34: #{tpu_custom_call.1} parent=31 // pred_check_branch
          %259 = sbr.rel (%p257) target = $region36
        $region35: #{tpu_custom_call.1} parent=31 // pred_region
          %260 = dma.done %s253, 128
        $region36: #{tpu_custom_call.1} parent=31 // pred_fallthru
          _
        %s261 = sand.u32 %s28, 1
        %s262 = scalar_lea.sflag [#allocation6], %s261
        %s263 = sand.u32 %s76, 1
        %s264 = smul.addr %s263, 8
        %s265 = scalar_lea.vmem [#allocation5], %s264
        // Predicated region
        $region37: #{tpu_custom_call.1} parent=31 // pred_check
          %p266 = pneg %p89
        $region38: #{tpu_custom_call.1} parent=31 // pred_check_branch
          %268 = sbr.rel (%p266) target = $region40
        $region39: #{tpu_custom_call.1} parent=31 // pred_region
          %269 = dma.done %s262, 128
        $region40: #{tpu_custom_call.1} parent=31 // pred_fallthru
          _
        %s270 = sand.u32 %s28, 1
        %s271 = scalar_lea.sflag [#allocation6], %s270
        %s272 = sand.u32 %s102, 1
        %s273 = smul.addr %s272, 8
        %s274 = scalar_lea.vmem [#allocation7], %s273
        // Predicated region
        $region41: #{tpu_custom_call.1} parent=31 // pred_check
          %p275 = pneg %p115
        $region42: #{tpu_custom_call.1} parent=31 // pred_check_branch
          %277 = sbr.rel (%p275) target = $region44
        $region43: #{tpu_custom_call.1} parent=31 // pred_region
          %278 = dma.done %s271, 128
        $region44: #{tpu_custom_call.1} parent=31 // pred_fallthru
          _
        %s279 = sand.u32 %s50, 1
        %s280 = scalar_lea.sflag [#allocation3], %s279
        %s281 = sand.u32 %s50, 1
        %s282 = smul.addr %s281, 8
        %s283 = scalar_lea.vmem [#allocation2], %s282
        %p284 = pneg %p63
        %p285 = pneg %p60
        %s286 = sand.u32 %s28, 1
        %s287 = scalar_lea.sflag [#allocation6], %s286
        %s288 = sand.u32 %s76, 1
        %s289 = smul.addr %s288, 8
        %s290 = scalar_lea.vmem [#allocation5], %s289
        %p291 = pneg %p89
        %p292 = pneg %p86
        %s293 = sand.u32 %s28, 1
        %s294 = scalar_lea.sflag [#allocation6], %s293
        %s295 = sand.u32 %s102, 1
        %s296 = smul.addr %s295, 8
        %s297 = scalar_lea.vmem [#allocation7], %s296
        %p298 = pneg %p115
        %p299 = pneg %p112
        %p300 = pneg %p143
        %p301 = pneg %p140
        %s302 = sand.u32 %s130, 1
        %s303 = scalar_lea.sflag [#allocation4], %s302
        %s304 = sand.u32 %s130, 1
        %s305 = smul.addr %s304, 8
        %s306 = scalar_lea.vmem [#allocation8], %s305
        %p307 = pneg %p171
        %p308 = pneg %p168
        %s309 = sand.u32 %s158, 1
        %s310 = scalar_lea.sflag [#allocation10], %s309
        %s311 = sand.u32 %s158, 1
        %s312 = smul.addr %s311, 8
        %s313 = scalar_lea.vmem [#allocation9], %s312
        %v314 = vld [vmem:[%s256] sm:$0xff]
        %v315 = vld [vmem:[%s265] sm:$0xff]
        %v316 = vld [vmem:[%s274] sm:$0xff]
        %v317 = vmul.f32 %v314, 0.17677669
        %vm318 = vcmask 261120
        %v320 = vsel %vm318, %v317, 0
        %v323 = vsel %vm318, %v315, 0
        %325 = vmatprep.subr.mxu0 0.0
        %v326 = vand.u32 %v323, 4294901760
        %327 = vmatpush1.xpose.msra.mxu0 %v326
        %328 = vmatprep.subr.mxu0 0.0
        %329 = vmatpush1.xpose.msra.mxu0 0.0
        %330 = vmatprep.subr.mxu0 0.0
        %331 = vmatpush1.xpose.msra.mxu0 0.0
        %332 = vmatprep.subr.mxu0 0.0
        %333 = vmatpush1.xpose.msra.mxu0 0.0
        %334 = vmatprep.subr.mxu0 0.0
        %335 = vmatpush1.xpose.msra.mxu0 0.0
        %336 = vmatprep.subr.mxu0 0.0
        %337 = vmatpush1.xpose.msra.mxu0 0.0
        %338 = vmatprep.subr.mxu0 0.0
        %339 = vmatpush1.xpose.msra.mxu0 0.0
        %340 = vmatprep.subr.mxu0 0.0
        %341 = vmatpush1.xpose.msra.mxu0 0.0
        %342 = vmatprep.subr.mxu0 0.0
        %343 = vmatpush1.xpose.msra.mxu0 0.0
        %344 = vmatprep.subr.mxu0 0.0
        %345 = vmatpush1.xpose.msra.mxu0 0.0
        %346 = vmatprep.subr.mxu0 0.0
        %347 = vmatpush1.xpose.msra.mxu0 0.0
        %348 = vmatprep.subr.mxu0 0.0
        %349 = vmatpush1.xpose.msra.mxu0 0.0
        %350 = vmatprep.subr.mxu0 0.0
        %351 = vmatpush1.xpose.msra.mxu0 0.0
        %352 = vmatprep.subr.mxu0 0.0
        %353 = vmatpush1.xpose.msra.mxu0 0.0
        %354 = vmatprep.subr.mxu0 0.0
        %355 = vmatpush1.xpose.msra.mxu0 0.0
        %356 = vmatprep.subr.mxu0 0.0
        %357 = vmatpush1.xpose.msra.mxu0 0.0
        %358 = vmatprep.subr.mxu0 0.0
        %359 = vmatpush1.xpose.msra.mxu0 0.0
        %360 = vmatprep.subr.mxu0 0.0
        %361 = vmatpush1.xpose.msra.mxu0 0.0
        %362 = vmatprep.subr.mxu0 0.0
        %363 = vmatpush1.xpose.msra.mxu0 0.0
        %364 = vmatprep.subr.mxu0 0.0
        %365 = vmatpush1.xpose.msra.mxu0 0.0
        %366 = vmatprep.subr.mxu0 0.0
        %367 = vmatpush1.xpose.msra.mxu0 0.0
        %368 = vmatprep.subr.mxu0 0.0
        %369 = vmatpush1.xpose.msra.mxu0 0.0
        %370 = vmatprep.subr.mxu0 0.0
        %371 = vmatpush1.xpose.msra.mxu0 0.0
        %372 = vmatprep.subr.mxu0 0.0
        %373 = vmatpush1.xpose.msra.mxu0 0.0
        %374 = vmatprep.subr.mxu0 0.0
        %375 = vmatpush1.xpose.msra.mxu0 0.0
        %376 = vmatprep.subr.mxu0 0.0
        %377 = vmatpush1.xpose.msra.mxu0 0.0
        %378 = vmatprep.subr.mxu0 0.0
        %379 = vmatpush1.xpose.msra.mxu0 0.0
        %380 = vmatprep.subr.mxu0 0.0
        %381 = vmatpush1.xpose.msra.mxu0 0.0
        %382 = vmatprep.subr.mxu0 0.0
        %383 = vmatpush1.xpose.msra.mxu0 0.0
        %384 = vmatprep.subr.mxu0 0.0
        %385 = vmatpush1.xpose.msra.mxu0 0.0
        %386 = vmatprep.subr.mxu0 0.0
        %387 = vmatpush1.xpose.msra.mxu0 0.0
        %388 = vmatprep.subr.mxu0 0.0
        %389 = vmatpush1.xpose.msra.mxu0 0.0
        %390 = vmatprep.mubr.f32.mxu0 0.0
        %v391 = vand.u32 %v320, 4294901760
        %v392 = vsub.f32 %v320, %v391
        %v393 = vand.u32 %v392, 4294901760
        %v394 = vsub.f32 %v392, %v393
        %v395 = vand.u32 %v394, 4294901760
        %396 = vmatmul.mubr.f32.gmra.mrb[0].mxu0 %v395
        %v397 = vpop.f32.mrb[0].mxu0
        %v398 = vadd.f32 0.0, %v397
        %v399 = vpop.f32.mrb[0].mxu0
        %400 = vdwg.mxu0
        %401 = vmatprep.subr.mxu0 0.0
        %v402 = vand.u32 %v323, 4294901760
        %v403 = vsub.f32 %v323, %v402
        %v404 = vand.u32 %v403, 4294901760
        %v405 = vsub.f32 %v403, %v404
        %v406 = vand.u32 %v405, 4294901760
        %407 = vmatpush1.xpose.msra.mxu0 %v406
        %408 = vmatprep.subr.mxu0 0.0
        %409 = vmatpush1.xpose.msra.mxu0 0.0
        %410 = vmatprep.subr.mxu0 0.0
        %411 = vmatpush1.xpose.msra.mxu0 0.0
        %412 = vmatprep.subr.mxu0 0.0
        %413 = vmatpush1.xpose.msra.mxu0 0.0
        %414 = vmatprep.subr.mxu0 0.0
        %415 = vmatpush1.xpose.msra.mxu0 0.0
        %416 = vmatprep.subr.mxu0 0.0
        %417 = vmatpush1.xpose.msra.mxu0 0.0
        %418 = vmatprep.subr.mxu0 0.0
        %419 = vmatpush1.xpose.msra.mxu0 0.0
        %420 = vmatprep.subr.mxu0 0.0
        %421 = vmatpush1.xpose.msra.mxu0 0.0
        %422 = vmatprep.subr.mxu0 0.0
        %423 = vmatpush1.xpose.msra.mxu0 0.0
        %424 = vmatprep.subr.mxu0 0.0
        %425 = vmatpush1.xpose.msra.mxu0 0.0
        %426 = vmatprep.subr.mxu0 0.0
        %427 = vmatpush1.xpose.msra.mxu0 0.0
        %428 = vmatprep.subr.mxu0 0.0
        %429 = vmatpush1.xpose.msra.mxu0 0.0
        %430 = vmatprep.subr.mxu0 0.0
        %431 = vmatpush1.xpose.msra.mxu0 0.0
        %432 = vmatprep.subr.mxu0 0.0
        %433 = vmatpush1.xpose.msra.mxu0 0.0
        %434 = vmatprep.subr.mxu0 0.0
        %435 = vmatpush1.xpose.msra.mxu0 0.0
        %436 = vmatprep.subr.mxu0 0.0
        %437 = vmatpush1.xpose.msra.mxu0 0.0
        %438 = vmatprep.subr.mxu0 0.0
        %439 = vmatpush1.xpose.msra.mxu0 0.0
        %440 = vmatprep.subr.mxu0 0.0
        %441 = vmatpush1.xpose.msra.mxu0 0.0
        %442 = vmatprep.subr.mxu0 0.0
        %443 = vmatpush1.xpose.msra.mxu0 0.0
        %444 = vmatprep.subr.mxu0 0.0
        %445 = vmatpush1.xpose.msra.mxu0 0.0
        %446 = vmatprep.subr.mxu0 0.0
        %447 = vmatpush1.xpose.msra.mxu0 0.0
        %448 = vmatprep.subr.mxu0 0.0
        %449 = vmatpush1.xpose.msra.mxu0 0.0
        %450 = vmatprep.subr.mxu0 0.0
        %451 = vmatpush1.xpose.msra.mxu0 0.0
        %452 = vmatprep.subr.mxu0 0.0
        %453 = vmatpush1.xpose.msra.mxu0 0.0
        %454 = vmatprep.subr.mxu0 0.0
        %455 = vmatpush1.xpose.msra.mxu0 0.0
        %456 = vmatprep.subr.mxu0 0.0
        %457 = vmatpush1.xpose.msra.mxu0 0.0
        %458 = vmatprep.subr.mxu0 0.0
        %459 = vmatpush1.xpose.msra.mxu0 0.0
        %460 = vmatprep.subr.mxu0 0.0
        %461 = vmatpush1.xpose.msra.mxu0 0.0
        %462 = vmatprep.subr.mxu0 0.0
        %463 = vmatpush1.xpose.msra.mxu0 0.0
        %464 = vmatprep.subr.mxu0 0.0
        %465 = vmatpush1.xpose.msra.mxu0 0.0
        %466 = vmatprep.subr.mxu0 0.0
        %467 = vmatpush1.xpose.msra.mxu0 0.0
        %468 = vmatprep.subr.mxu0 0.0
        %469 = vmatpush1.xpose.msra.mxu0 0.0
        %470 = vmatprep.mubr.f32.mxu0 0.0
        %v471 = vand.u32 %v320, 4294901760
        %472 = vmatmul.mubr.f32.gmra.mrb[0].mxu0 %v471
        %v473 = vpop.f32.mrb[0].mxu0
        %v474 = vadd.f32 %v398, %v473
        %v475 = vpop.f32.mrb[0].mxu0
        %476 = vdwg.mxu0
        %477 = vmatprep.subr.mxu0 0.0
        %v478 = vand.u32 %v323, 4294901760
        %v479 = vsub.f32 %v323, %v478
        %480 = vmatpush1.xpose.msra.mxu0 %v479
        %481 = vmatprep.subr.mxu0 0.0
        %482 = vmatpush1.xpose.msra.mxu0 0.0
        %483 = vmatprep.subr.mxu0 0.0
        %484 = vmatpush1.xpose.msra.mxu0 0.0
        %485 = vmatprep.subr.mxu0 0.0
        %486 = vmatpush1.xpose.msra.mxu0 0.0
        %487 = vmatprep.subr.mxu0 0.0
        %488 = vmatpush1.xpose.msra.mxu0 0.0
        %489 = vmatprep.subr.mxu0 0.0
        %490 = vmatpush1.xpose.msra.mxu0 0.0
        %491 = vmatprep.subr.mxu0 0.0
        %492 = vmatpush1.xpose.msra.mxu0 0.0
        %493 = vmatprep.subr.mxu0 0.0
        %494 = vmatpush1.xpose.msra.mxu0 0.0
        %495 = vmatprep.subr.mxu0 0.0
        %496 = vmatpush1.xpose.msra.mxu0 0.0
        %497 = vmatprep.subr.mxu0 0.0
        %498 = vmatpush1.xpose.msra.mxu0 0.0
        %499 = vmatprep.subr.mxu0 0.0
        %500 = vmatpush1.xpose.msra.mxu0 0.0
        %501 = vmatprep.subr.mxu0 0.0
        %502 = vmatpush1.xpose.msra.mxu0 0.0
        %503 = vmatprep.subr.mxu0 0.0
        %504 = vmatpush1.xpose.msra.mxu0 0.0
        %505 = vmatprep.subr.mxu0 0.0
        %506 = vmatpush1.xpose.msra.mxu0 0.0
        %507 = vmatprep.subr.mxu0 0.0
        %508 = vmatpush1.xpose.msra.mxu0 0.0
        %509 = vmatprep.subr.mxu0 0.0
        %510 = vmatpush1.xpose.msra.mxu0 0.0
        %511 = vmatprep.subr.mxu0 0.0
        %512 = vmatpush1.xpose.msra.mxu0 0.0
        %513 = vmatprep.subr.mxu0 0.0
        %514 = vmatpush1.xpose.msra.mxu0 0.0
        %515 = vmatprep.subr.mxu0 0.0
        %516 = vmatpush1.xpose.msra.mxu0 0.0
        %517 = vmatprep.subr.mxu0 0.0
        %518 = vmatpush1.xpose.msra.mxu0 0.0
        %519 = vmatprep.subr.mxu0 0.0
        %520 = vmatpush1.xpose.msra.mxu0 0.0
        %521 = vmatprep.subr.mxu0 0.0
        %522 = vmatpush1.xpose.msra.mxu0 0.0
        %523 = vmatprep.subr.mxu0 0.0
        %524 = vmatpush1.xpose.msra.mxu0 0.0
        %525 = vmatprep.subr.mxu0 0.0
        %526 = vmatpush1.xpose.msra.mxu0 0.0
        %527 = vmatprep.subr.mxu0 0.0
        %528 = vmatpush1.xpose.msra.mxu0 0.0
        %529 = vmatprep.subr.mxu0 0.0
        %530 = vmatpush1.xpose.msra.mxu0 0.0
        %531 = vmatprep.subr.mxu0 0.0
        %532 = vmatpush1.xpose.msra.mxu0 0.0
        %533 = vmatprep.subr.mxu0 0.0
        %534 = vmatpush1.xpose.msra.mxu0 0.0
        %535 = vmatprep.subr.mxu0 0.0
        %536 = vmatpush1.xpose.msra.mxu0 0.0
        %537 = vmatprep.subr.mxu0 0.0
        %538 = vmatpush1.xpose.msra.mxu0 0.0
        %539 = vmatprep.subr.mxu0 0.0
        %540 = vmatpush1.xpose.msra.mxu0 0.0
        %541 = vmatprep.subr.mxu0 0.0
        %542 = vmatpush1.xpose.msra.mxu0 0.0
        %543 = vmatprep.mubr.f32.mxu0 0.0
        %v544 = vand.u32 %v320, 4294901760
        %v545 = vsub.f32 %v320, %v544
        %546 = vmatmul.mubr.f32.gmra.mrb[0].mxu0 %v545
        %v547 = vpop.f32.mrb[0].mxu0
        %v548 = vadd.f32 %v474, %v547
        %v549 = vpop.f32.mrb[0].mxu0
        %550 = vdwg.mxu0
        %551 = vmatprep.subr.mxu0 0.0
        %v552 = vand.u32 %v323, 4294901760
        %553 = vmatpush1.xpose.msra.mxu0 %v552
        %554 = vmatprep.subr.mxu0 0.0
        %555 = vmatpush1.xpose.msra.mxu0 0.0
        %556 = vmatprep.subr.mxu0 0.0
        %557 = vmatpush1.xpose.msra.mxu0 0.0
        %558 = vmatprep.subr.mxu0 0.0
        %559 = vmatpush1.xpose.msra.mxu0 0.0
        %560 = vmatprep.subr.mxu0 0.0
        %561 = vmatpush1.xpose.msra.mxu0 0.0
        %562 = vmatprep.subr.mxu0 0.0
        %563 = vmatpush1.xpose.msra.mxu0 0.0
        %564 = vmatprep.subr.mxu0 0.0
        %565 = vmatpush1.xpose.msra.mxu0 0.0
        %566 = vmatprep.subr.mxu0 0.0
        %567 = vmatpush1.xpose.msra.mxu0 0.0
        %568 = vmatprep.subr.mxu0 0.0
        %569 = vmatpush1.xpose.msra.mxu0 0.0
        %570 = vmatprep.subr.mxu0 0.0
        %571 = vmatpush1.xpose.msra.mxu0 0.0
        %572 = vmatprep.subr.mxu0 0.0
        %573 = vmatpush1.xpose.msra.mxu0 0.0
        %574 = vmatprep.subr.mxu0 0.0
        %575 = vmatpush1.xpose.msra.mxu0 0.0
        %576 = vmatprep.subr.mxu0 0.0
        %577 = vmatpush1.xpose.msra.mxu0 0.0
        %578 = vmatprep.subr.mxu0 0.0
        %579 = vmatpush1.xpose.msra.mxu0 0.0
        %580 = vmatprep.subr.mxu0 0.0
        %581 = vmatpush1.xpose.msra.mxu0 0.0
        %582 = vmatprep.subr.mxu0 0.0
        %583 = vmatpush1.xpose.msra.mxu0 0.0
        %584 = vmatprep.subr.mxu0 0.0
        %585 = vmatpush1.xpose.msra.mxu0 0.0
        %586 = vmatprep.subr.mxu0 0.0
        %587 = vmatpush1.xpose.msra.mxu0 0.0
        %588 = vmatprep.subr.mxu0 0.0
        %589 = vmatpush1.xpose.msra.mxu0 0.0
        %590 = vmatprep.subr.mxu0 0.0
        %591 = vmatpush1.xpose.msra.mxu0 0.0
        %592 = vmatprep.subr.mxu0 0.0
        %593 = vmatpush1.xpose.msra.mxu0 0.0
        %594 = vmatprep.subr.mxu0 0.0
        %595 = vmatpush1.xpose.msra.mxu0 0.0
        %596 = vmatprep.subr.mxu0 0.0
        %597 = vmatpush1.xpose.msra.mxu0 0.0
        %598 = vmatprep.subr.mxu0 0.0
        %599 = vmatpush1.xpose.msra.mxu0 0.0
        %600 = vmatprep.subr.mxu0 0.0
        %601 = vmatpush1.xpose.msra.mxu0 0.0
        %602 = vmatprep.subr.mxu0 0.0
        %603 = vmatpush1.xpose.msra.mxu0 0.0
        %604 = vmatprep.subr.mxu0 0.0
        %605 = vmatpush1.xpose.msra.mxu0 0.0
        %606 = vmatprep.subr.mxu0 0.0
        %607 = vmatpush1.xpose.msra.mxu0 0.0
        %608 = vmatprep.subr.mxu0 0.0
        %609 = vmatpush1.xpose.msra.mxu0 0.0
        %610 = vmatprep.subr.mxu0 0.0
        %611 = vmatpush1.xpose.msra.mxu0 0.0
        %612 = vmatprep.subr.mxu0 0.0
        %613 = vmatpush1.xpose.msra.mxu0 0.0
        %614 = vmatprep.subr.mxu0 0.0
        %615 = vmatpush1.xpose.msra.mxu0 0.0
        %616 = vmatprep.mubr.f32.mxu0 0.0
        %v617 = vand.u32 %v320, 4294901760
        %v618 = vsub.f32 %v320, %v617
        %v619 = vand.u32 %v618, 4294901760
        %620 = vmatmul.mubr.f32.gmra.mrb[0].mxu0 %v619
        %v621 = vpop.f32.mrb[0].mxu0
        %v622 = vadd.f32 %v548, %v621
        %v623 = vpop.f32.mrb[0].mxu0
        %624 = vdwg.mxu0
        %625 = vmatprep.subr.mxu0 0.0
        %v626 = vand.u32 %v323, 4294901760
        %v627 = vsub.f32 %v323, %v626
        %v628 = vand.u32 %v627, 4294901760
        %629 = vmatpush1.xpose.msra.mxu0 %v628
        %630 = vmatprep.subr.mxu0 0.0
        %631 = vmatpush1.xpose.msra.mxu0 0.0
        %632 = vmatprep.subr.mxu0 0.0
        %633 = vmatpush1.xpose.msra.mxu0 0.0
        %634 = vmatprep.subr.mxu0 0.0
        %635 = vmatpush1.xpose.msra.mxu0 0.0
        %636 = vmatprep.subr.mxu0 0.0
        %637 = vmatpush1.xpose.msra.mxu0 0.0
        %638 = vmatprep.subr.mxu0 0.0
        %639 = vmatpush1.xpose.msra.mxu0 0.0
        %640 = vmatprep.subr.mxu0 0.0
        %641 = vmatpush1.xpose.msra.mxu0 0.0
        %642 = vmatprep.subr.mxu0 0.0
        %643 = vmatpush1.xpose.msra.mxu0 0.0
        %644 = vmatprep.subr.mxu0 0.0
        %645 = vmatpush1.xpose.msra.mxu0 0.0
        %646 = vmatprep.subr.mxu0 0.0
        %647 = vmatpush1.xpose.msra.mxu0 0.0
        %648 = vmatprep.subr.mxu0 0.0
        %649 = vmatpush1.xpose.msra.mxu0 0.0
        %650 = vmatprep.subr.mxu0 0.0
        %651 = vmatpush1.xpose.msra.mxu0 0.0
        %652 = vmatprep.subr.mxu0 0.0
        %653 = vmatpush1.xpose.msra.mxu0 0.0
        %654 = vmatprep.subr.mxu0 0.0
        %655 = vmatpush1.xpose.msra.mxu0 0.0
        %656 = vmatprep.subr.mxu0 0.0
        %657 = vmatpush1.xpose.msra.mxu0 0.0
        %658 = vmatprep.subr.mxu0 0.0
        %659 = vmatpush1.xpose.msra.mxu0 0.0
        %660 = vmatprep.subr.mxu0 0.0
        %661 = vmatpush1.xpose.msra.mxu0 0.0
        %662 = vmatprep.subr.mxu0 0.0
        %663 = vmatpush1.xpose.msra.mxu0 0.0
        %664 = vmatprep.subr.mxu0 0.0
        %665 = vmatpush1.xpose.msra.mxu0 0.0
        %666 = vmatprep.subr.mxu0 0.0
        %667 = vmatpush1.xpose.msra.mxu0 0.0
        %668 = vmatprep.subr.mxu0 0.0
        %669 = vmatpush1.xpose.msra.mxu0 0.0
        %670 = vmatprep.subr.mxu0 0.0
        %671 = vmatpush1.xpose.msra.mxu0 0.0
        %672 = vmatprep.subr.mxu0 0.0
        %673 = vmatpush1.xpose.msra.mxu0 0.0
        %674 = vmatprep.subr.mxu0 0.0
        %675 = vmatpush1.xpose.msra.mxu0 0.0
        %676 = vmatprep.subr.mxu0 0.0
        %677 = vmatpush1.xpose.msra.mxu0 0.0
        %678 = vmatprep.subr.mxu0 0.0
        %679 = vmatpush1.xpose.msra.mxu0 0.0
        %680 = vmatprep.subr.mxu0 0.0
        %681 = vmatpush1.xpose.msra.mxu0 0.0
        %682 = vmatprep.subr.mxu0 0.0
        %683 = vmatpush1.xpose.msra.mxu0 0.0
        %684 = vmatprep.subr.mxu0 0.0
        %685 = vmatpush1.xpose.msra.mxu0 0.0
        %686 = vmatprep.subr.mxu0 0.0
        %687 = vmatpush1.xpose.msra.mxu0 0.0
        %688 = vmatprep.subr.mxu0 0.0
        %689 = vmatpush1.xpose.msra.mxu0 0.0
        %690 = vmatprep.subr.mxu0 0.0
        %691 = vmatpush1.xpose.msra.mxu0 0.0
        %692 = vmatprep.mubr.f32.mxu0 0.0
        %v693 = vand.u32 %v320, 4294901760
        %694 = vmatmul.mubr.f32.gmra.mrb[0].mxu0 %v693
        %v695 = vpop.f32.mrb[0].mxu0
        %v696 = vadd.f32 %v622, %v695
        %v697 = vpop.f32.mrb[0].mxu0
        %698 = vdwg.mxu0
        %699 = vmatprep.subr.mxu0 0.0
        %v700 = vand.u32 %v323, 4294901760
        %701 = vmatpush1.xpose.msra.mxu0 %v700
        %702 = vmatprep.subr.mxu0 0.0
        %703 = vmatpush1.xpose.msra.mxu0 0.0
        %704 = vmatprep.subr.mxu0 0.0
        %705 = vmatpush1.xpose.msra.mxu0 0.0
        %706 = vmatprep.subr.mxu0 0.0
        %707 = vmatpush1.xpose.msra.mxu0 0.0
        %708 = vmatprep.subr.mxu0 0.0
        %709 = vmatpush1.xpose.msra.mxu0 0.0
        %710 = vmatprep.subr.mxu0 0.0
        %711 = vmatpush1.xpose.msra.mxu0 0.0
        %712 = vmatprep.subr.mxu0 0.0
        %713 = vmatpush1.xpose.msra.mxu0 0.0
        %714 = vmatprep.subr.mxu0 0.0
        %715 = vmatpush1.xpose.msra.mxu0 0.0
        %716 = vmatprep.subr.mxu0 0.0
        %717 = vmatpush1.xpose.msra.mxu0 0.0
        %718 = vmatprep.subr.mxu0 0.0
        %719 = vmatpush1.xpose.msra.mxu0 0.0
        %720 = vmatprep.subr.mxu0 0.0
        %721 = vmatpush1.xpose.msra.mxu0 0.0
        %722 = vmatprep.subr.mxu0 0.0
        %723 = vmatpush1.xpose.msra.mxu0 0.0
        %724 = vmatprep.subr.mxu0 0.0
        %725 = vmatpush1.xpose.msra.mxu0 0.0
        %726 = vmatprep.subr.mxu0 0.0
        %727 = vmatpush1.xpose.msra.mxu0 0.0
        %728 = vmatprep.subr.mxu0 0.0
        %729 = vmatpush1.xpose.msra.mxu0 0.0
        %730 = vmatprep.subr.mxu0 0.0
        %731 = vmatpush1.xpose.msra.mxu0 0.0
        %732 = vmatprep.subr.mxu0 0.0
        %733 = vmatpush1.xpose.msra.mxu0 0.0
        %734 = vmatprep.subr.mxu0 0.0
        %735 = vmatpush1.xpose.msra.mxu0 0.0
        %736 = vmatprep.subr.mxu0 0.0
        %737 = vmatpush1.xpose.msra.mxu0 0.0
        %738 = vmatprep.subr.mxu0 0.0
        %739 = vmatpush1.xpose.msra.mxu0 0.0
        %740 = vmatprep.subr.mxu0 0.0
        %741 = vmatpush1.xpose.msra.mxu0 0.0
        %742 = vmatprep.subr.mxu0 0.0
        %743 = vmatpush1.xpose.msra.mxu0 0.0
        %744 = vmatprep.subr.mxu0 0.0
        %745 = vmatpush1.xpose.msra.mxu0 0.0
        %746 = vmatprep.subr.mxu0 0.0
        %747 = vmatpush1.xpose.msra.mxu0 0.0
        %748 = vmatprep.subr.mxu0 0.0
        %749 = vmatpush1.xpose.msra.mxu0 0.0
        %750 = vmatprep.subr.mxu0 0.0
        %751 = vmatpush1.xpose.msra.mxu0 0.0
        %752 = vmatprep.subr.mxu0 0.0
        %753 = vmatpush1.xpose.msra.mxu0 0.0
        %754 = vmatprep.subr.mxu0 0.0
        %755 = vmatpush1.xpose.msra.mxu0 0.0
        %756 = vmatprep.subr.mxu0 0.0
        %757 = vmatpush1.xpose.msra.mxu0 0.0
        %758 = vmatprep.subr.mxu0 0.0
        %759 = vmatpush1.xpose.msra.mxu0 0.0
        %760 = vmatprep.subr.mxu0 0.0
        %761 = vmatpush1.xpose.msra.mxu0 0.0
        %762 = vmatprep.subr.mxu0 0.0
        %763 = vmatpush1.xpose.msra.mxu0 0.0
        %764 = vmatprep.mubr.f32.mxu0 0.0
        %v765 = vand.u32 %v320, 4294901760
        %766 = vmatmul.mubr.f32.gmra.mrb[0].mxu0 %v765
        %v767 = vpop.f32.mrb[0].mxu0
        %v768 = vadd.f32 %v696, %v767
        %v769 = vpop.f32.mrb[0].mxu0
        %770 = vdwg.mxu0
        %vm771 = vcmask 64512
        %v772 = vsel %vm771, %v768, -inf
        %773 = vmax.xlane.f32.xlu0 %v772
        %v774 = vpop.xlane.xlu0 %773
        %v775 = vsub.f32 %v768, %v774
        %v776 = vmul.f32 %v775, 1.442695
        %v777 = vpow.pop %v776
        %v778 = vsel %vm771, %v777, 0.0
        %779 = vadd.xlane.f32.xlu0 %v778
        %v780 = vpop.xlane.xlu0 %779
        %v781 = vrcp.pop %v780
        %v782 = vmul.f32 1.0, %v781
        %v783 = vmul.f32 %v777, %v782
        %v785 = vsel %vm771, %v783, 0
        %787 = vmatprep.subr.mxu0 0.0
        %v788 = vand.u32 %v316, 4294901760
        %789 = vmatpush1.msra.mxu0 %v788
        %790 = vmatprep.subr.mxu0 0.0
        %791 = vmatpush1.msra.mxu0 0.0
        %792 = vmatprep.subr.mxu0 0.0
        %793 = vmatpush1.msra.mxu0 0.0
        %794 = vmatprep.subr.mxu0 0.0
        %795 = vmatpush1.msra.mxu0 0.0
        %796 = vmatprep.subr.mxu0 0.0
        %797 = vmatpush1.msra.mxu0 0.0
        %798 = vmatprep.subr.mxu0 0.0
        %799 = vmatpush1.msra.mxu0 0.0
        %800 = vmatprep.subr.mxu0 0.0
        %801 = vmatpush1.msra.mxu0 0.0
        %802 = vmatprep.subr.mxu0 0.0
        %803 = vmatpush1.msra.mxu0 0.0
        %804 = vmatprep.subr.mxu0 0.0
        %805 = vmatpush1.msra.mxu0 0.0
        %806 = vmatprep.subr.mxu0 0.0
        %807 = vmatpush1.msra.mxu0 0.0
        %808 = vmatprep.subr.mxu0 0.0
        %809 = vmatpush1.msra.mxu0 0.0
        %810 = vmatprep.subr.mxu0 0.0
        %811 = vmatpush1.msra.mxu0 0.0
        %812 = vmatprep.subr.mxu0 0.0
        %813 = vmatpush1.msra.mxu0 0.0
        %814 = vmatprep.subr.mxu0 0.0
        %815 = vmatpush1.msra.mxu0 0.0
        %816 = vmatprep.subr.mxu0 0.0
        %817 = vmatpush1.msra.mxu0 0.0
        %818 = vmatprep.subr.mxu0 0.0
        %819 = vmatpush1.msra.mxu0 0.0
        %820 = vmatprep.subr.mxu0 0.0
        %821 = vmatpush1.msra.mxu0 0.0
        %822 = vmatprep.subr.mxu0 0.0
        %823 = vmatpush1.msra.mxu0 0.0
        %824 = vmatprep.subr.mxu0 0.0
        %825 = vmatpush1.msra.mxu0 0.0
        %826 = vmatprep.subr.mxu0 0.0
        %827 = vmatpush1.msra.mxu0 0.0
        %828 = vmatprep.subr.mxu0 0.0
        %829 = vmatpush1.msra.mxu0 0.0
        %830 = vmatprep.subr.mxu0 0.0
        %831 = vmatpush1.msra.mxu0 0.0
        %832 = vmatprep.subr.mxu0 0.0
        %833 = vmatpush1.msra.mxu0 0.0
        %834 = vmatprep.subr.mxu0 0.0
        %835 = vmatpush1.msra.mxu0 0.0
        %836 = vmatprep.subr.mxu0 0.0
        %837 = vmatpush1.msra.mxu0 0.0
        %838 = vmatprep.subr.mxu0 0.0
        %839 = vmatpush1.msra.mxu0 0.0
        %840 = vmatprep.subr.mxu0 0.0
        %841 = vmatpush1.msra.mxu0 0.0
        %842 = vmatprep.subr.mxu0 0.0
        %843 = vmatpush1.msra.mxu0 0.0
        %844 = vmatprep.subr.mxu0 0.0
        %845 = vmatpush1.msra.mxu0 0.0
        %846 = vmatprep.subr.mxu0 0.0
        %847 = vmatpush1.msra.mxu0 0.0
        %848 = vmatprep.subr.mxu0 0.0
        %849 = vmatpush1.msra.mxu0 0.0
        %850 = vmatprep.subr.mxu0 0.0
        %851 = vmatpush1.msra.mxu0 0.0
        %852 = vmatprep.mubr.f32.mxu0 0.0
        %v853 = vand.u32 %v785, 4294901760
        %v854 = vsub.f32 %v785, %v853
        %v855 = vand.u32 %v854, 4294901760
        %v856 = vsub.f32 %v854, %v855
        %v857 = vand.u32 %v856, 4294901760
        %858 = vmatmul.mubr.f32.gmra.mrb[0].mxu0 %v857
        %v859 = vpop.f32.mrb[0].mxu0
        %v860 = vadd.f32 0.0, %v859
        %v861 = vpop.f32.mrb[0].mxu0
        %862 = vdwg.mxu0
        %863 = vmatprep.subr.mxu0 0.0
        %v864 = vand.u32 %v316, 4294901760
        %v865 = vsub.f32 %v316, %v864
        %v866 = vand.u32 %v865, 4294901760
        %v867 = vsub.f32 %v865, %v866
        %v868 = vand.u32 %v867, 4294901760
        %869 = vmatpush1.msra.mxu0 %v868
        %870 = vmatprep.subr.mxu0 0.0
        %871 = vmatpush1.msra.mxu0 0.0
        %872 = vmatprep.subr.mxu0 0.0
        %873 = vmatpush1.msra.mxu0 0.0
        %874 = vmatprep.subr.mxu0 0.0
        %875 = vmatpush1.msra.mxu0 0.0
        %876 = vmatprep.subr.mxu0 0.0
        %877 = vmatpush1.msra.mxu0 0.0
        %878 = vmatprep.subr.mxu0 0.0
        %879 = vmatpush1.msra.mxu0 0.0
        %880 = vmatprep.subr.mxu0 0.0
        %881 = vmatpush1.msra.mxu0 0.0
        %882 = vmatprep.subr.mxu0 0.0
        %883 = vmatpush1.msra.mxu0 0.0
        %884 = vmatprep.subr.mxu0 0.0
        %885 = vmatpush1.msra.mxu0 0.0
        %886 = vmatprep.subr.mxu0 0.0
        %887 = vmatpush1.msra.mxu0 0.0
        %888 = vmatprep.subr.mxu0 0.0
        %889 = vmatpush1.msra.mxu0 0.0
        %890 = vmatprep.subr.mxu0 0.0
        %891 = vmatpush1.msra.mxu0 0.0
        %892 = vmatprep.subr.mxu0 0.0
        %893 = vmatpush1.msra.mxu0 0.0
        %894 = vmatprep.subr.mxu0 0.0
        %895 = vmatpush1.msra.mxu0 0.0
        %896 = vmatprep.subr.mxu0 0.0
        %897 = vmatpush1.msra.mxu0 0.0
        %898 = vmatprep.subr.mxu0 0.0
        %899 = vmatpush1.msra.mxu0 0.0
        %900 = vmatprep.subr.mxu0 0.0
        %901 = vmatpush1.msra.mxu0 0.0
        %902 = vmatprep.subr.mxu0 0.0
        %903 = vmatpush1.msra.mxu0 0.0
        %904 = vmatprep.subr.mxu0 0.0
        %905 = vmatpush1.msra.mxu0 0.0
        %906 = vmatprep.subr.mxu0 0.0
        %907 = vmatpush1.msra.mxu0 0.0
        %908 = vmatprep.subr.mxu0 0.0
        %909 = vmatpush1.msra.mxu0 0.0
        %910 = vmatprep.subr.mxu0 0.0
        %911 = vmatpush1.msra.mxu0 0.0
        %912 = vmatprep.subr.mxu0 0.0
        %913 = vmatpush1.msra.mxu0 0.0
        %914 = vmatprep.subr.mxu0 0.0
        %915 = vmatpush1.msra.mxu0 0.0
        %916 = vmatprep.subr.mxu0 0.0
        %917 = vmatpush1.msra.mxu0 0.0
        %918 = vmatprep.subr.mxu0 0.0
        %919 = vmatpush1.msra.mxu0 0.0
        %920 = vmatprep.subr.mxu0 0.0
        %921 = vmatpush1.msra.mxu0 0.0
        %922 = vmatprep.subr.mxu0 0.0
        %923 = vmatpush1.msra.mxu0 0.0
        %924 = vmatprep.subr.mxu0 0.0
        %925 = vmatpush1.msra.mxu0 0.0
        %926 = vmatprep.subr.mxu0 0.0
        %927 = vmatpush1.msra.mxu0 0.0
        %928 = vmatprep.subr.mxu0 0.0
        %929 = vmatpush1.msra.mxu0 0.0
        %930 = vmatprep.subr.mxu0 0.0
        %931 = vmatpush1.msra.mxu0 0.0
        %932 = vmatprep.mubr.f32.mxu0 0.0
        %v933 = vand.u32 %v785, 4294901760
        %934 = vmatmul.mubr.f32.gmra.mrb[0].mxu0 %v933
        %v935 = vpop.f32.mrb[0].mxu0
        %v936 = vadd.f32 %v860, %v935
        %v937 = vpop.f32.mrb[0].mxu0
        %938 = vdwg.mxu0
        %939 = vmatprep.subr.mxu0 0.0
        %v940 = vand.u32 %v316, 4294901760
        %v941 = vsub.f32 %v316, %v940
        %942 = vmatpush1.msra.mxu0 %v941
        %943 = vmatprep.subr.mxu0 0.0
        %944 = vmatpush1.msra.mxu0 0.0
        %945 = vmatprep.subr.mxu0 0.0
        %946 = vmatpush1.msra.mxu0 0.0
        %947 = vmatprep.subr.mxu0 0.0
        %948 = vmatpush1.msra.mxu0 0.0
        %949 = vmatprep.subr.mxu0 0.0
        %950 = vmatpush1.msra.mxu0 0.0
        %951 = vmatprep.subr.mxu0 0.0
        %952 = vmatpush1.msra.mxu0 0.0
        %953 = vmatprep.subr.mxu0 0.0
        %954 = vmatpush1.msra.mxu0 0.0
        %955 = vmatprep.subr.mxu0 0.0
        %956 = vmatpush1.msra.mxu0 0.0
        %957 = vmatprep.subr.mxu0 0.0
        %958 = vmatpush1.msra.mxu0 0.0
        %959 = vmatprep.subr.mxu0 0.0
        %960 = vmatpush1.msra.mxu0 0.0
        %961 = vmatprep.subr.mxu0 0.0
        %962 = vmatpush1.msra.mxu0 0.0
        %963 = vmatprep.subr.mxu0 0.0
        %964 = vmatpush1.msra.mxu0 0.0
        %965 = vmatprep.subr.mxu0 0.0
        %966 = vmatpush1.msra.mxu0 0.0
        %967 = vmatprep.subr.mxu0 0.0
        %968 = vmatpush1.msra.mxu0 0.0
        %969 = vmatprep.subr.mxu0 0.0
        %970 = vmatpush1.msra.mxu0 0.0
        %971 = vmatprep.subr.mxu0 0.0
        %972 = vmatpush1.msra.mxu0 0.0
        %973 = vmatprep.subr.mxu0 0.0
        %974 = vmatpush1.msra.mxu0 0.0
        %975 = vmatprep.subr.mxu0 0.0
        %976 = vmatpush1.msra.mxu0 0.0
        %977 = vmatprep.subr.mxu0 0.0
        %978 = vmatpush1.msra.mxu0 0.0
        %979 = vmatprep.subr.mxu0 0.0
        %980 = vmatpush1.msra.mxu0 0.0
        %981 = vmatprep.subr.mxu0 0.0
        %982 = vmatpush1.msra.mxu0 0.0
        %983 = vmatprep.subr.mxu0 0.0
        %984 = vmatpush1.msra.mxu0 0.0
        %985 = vmatprep.subr.mxu0 0.0
        %986 = vmatpush1.msra.mxu0 0.0
        %987 = vmatprep.subr.mxu0 0.0
        %988 = vmatpush1.msra.mxu0 0.0
        %989 = vmatprep.subr.mxu0 0.0
        %990 = vmatpush1.msra.mxu0 0.0
        %991 = vmatprep.subr.mxu0 0.0
        %992 = vmatpush1.msra.mxu0 0.0
        %993 = vmatprep.subr.mxu0 0.0
        %994 = vmatpush1.msra.mxu0 0.0
        %995 = vmatprep.subr.mxu0 0.0
        %996 = vmatpush1.msra.mxu0 0.0
        %997 = vmatprep.subr.mxu0 0.0
        %998 = vmatpush1.msra.mxu0 0.0
        %999 = vmatprep.subr.mxu0 0.0
        %1000 = vmatpush1.msra.mxu0 0.0
        %1001 = vmatprep.subr.mxu0 0.0
        %1002 = vmatpush1.msra.mxu0 0.0
        %1003 = vmatprep.subr.mxu0 0.0
        %1004 = vmatpush1.msra.mxu0 0.0
        %1005 = vmatprep.mubr.f32.mxu0 0.0
        %v1006 = vand.u32 %v785, 4294901760
        %v1007 = vsub.f32 %v785, %v1006
        %1008 = vmatmul.mubr.f32.gmra.mrb[0].mxu0 %v1007
        %v1009 = vpop.f32.mrb[0].mxu0
        %v1010 = vadd.f32 %v936, %v1009
        %v1011 = vpop.f32.mrb[0].mxu0
        %1012 = vdwg.mxu0
        %1013 = vmatprep.subr.mxu0 0.0
        %v1014 = vand.u32 %v316, 4294901760
        %1015 = vmatpush1.msra.mxu0 %v1014
        %1016 = vmatprep.subr.mxu0 0.0
        %1017 = vmatpush1.msra.mxu0 0.0
        %1018 = vmatprep.subr.mxu0 0.0
        %1019 = vmatpush1.msra.mxu0 0.0
        %1020 = vmatprep.subr.mxu0 0.0
        %1021 = vmatpush1.msra.mxu0 0.0
        %1022 = vmatprep.subr.mxu0 0.0
        %1023 = vmatpush1.msra.mxu0 0.0
        %1024 = vmatprep.subr.mxu0 0.0
        %1025 = vmatpush1.msra.mxu0 0.0
        %1026 = vmatprep.subr.mxu0 0.0
        %1027 = vmatpush1.msra.mxu0 0.0
        %1028 = vmatprep.subr.mxu0 0.0
        %1029 = vmatpush1.msra.mxu0 0.0
        %1030 = vmatprep.subr.mxu0 0.0
        %1031 = vmatpush1.msra.mxu0 0.0
        %1032 = vmatprep.subr.mxu0 0.0
        %1033 = vmatpush1.msra.mxu0 0.0
        %1034 = vmatprep.subr.mxu0 0.0
        %1035 = vmatpush1.msra.mxu0 0.0
        %1036 = vmatprep.subr.mxu0 0.0
        %1037 = vmatpush1.msra.mxu0 0.0
        %1038 = vmatprep.subr.mxu0 0.0
        %1039 = vmatpush1.msra.mxu0 0.0
        %1040 = vmatprep.subr.mxu0 0.0
        %1041 = vmatpush1.msra.mxu0 0.0
        %1042 = vmatprep.subr.mxu0 0.0
        %1043 = vmatpush1.msra.mxu0 0.0
        %1044 = vmatprep.subr.mxu0 0.0
        %1045 = vmatpush1.msra.mxu0 0.0
        %1046 = vmatprep.subr.mxu0 0.0
        %1047 = vmatpush1.msra.mxu0 0.0
        %1048 = vmatprep.subr.mxu0 0.0
        %1049 = vmatpush1.msra.mxu0 0.0
        %1050 = vmatprep.subr.mxu0 0.0
        %1051 = vmatpush1.msra.mxu0 0.0
        %1052 = vmatprep.subr.mxu0 0.0
        %1053 = vmatpush1.msra.mxu0 0.0
        %1054 = vmatprep.subr.mxu0 0.0
        %1055 = vmatpush1.msra.mxu0 0.0
        %1056 = vmatprep.subr.mxu0 0.0
        %1057 = vmatpush1.msra.mxu0 0.0
        %1058 = vmatprep.subr.mxu0 0.0
        %1059 = vmatpush1.msra.mxu0 0.0
        %1060 = vmatprep.subr.mxu0 0.0
        %1061 = vmatpush1.msra.mxu0 0.0
        %1062 = vmatprep.subr.mxu0 0.0
        %1063 = vmatpush1.msra.mxu0 0.0
        %1064 = vmatprep.subr.mxu0 0.0
        %1065 = vmatpush1.msra.mxu0 0.0
        %1066 = vmatprep.subr.mxu0 0.0
        %1067 = vmatpush1.msra.mxu0 0.0
        %1068 = vmatprep.subr.mxu0 0.0
        %1069 = vmatpush1.msra.mxu0 0.0
        %1070 = vmatprep.subr.mxu0 0.0
        %1071 = vmatpush1.msra.mxu0 0.0
        %1072 = vmatprep.subr.mxu0 0.0
        %1073 = vmatpush1.msra.mxu0 0.0
        %1074 = vmatprep.subr.mxu0 0.0
        %1075 = vmatpush1.msra.mxu0 0.0
        %1076 = vmatprep.subr.mxu0 0.0
        %1077 = vmatpush1.msra.mxu0 0.0
        %1078 = vmatprep.mubr.f32.mxu0 0.0
        %v1079 = vand.u32 %v785, 4294901760
        %v1080 = vsub.f32 %v785, %v1079
        %v1081 = vand.u32 %v1080, 4294901760
        %1082 = vmatmul.mubr.f32.gmra.mrb[0].mxu0 %v1081
        %v1083 = vpop.f32.mrb[0].mxu0
        %v1084 = vadd.f32 %v1010, %v1083
        %v1085 = vpop.f32.mrb[0].mxu0
        %1086 = vdwg.mxu0
        %1087 = vmatprep.subr.mxu0 0.0
        %v1088 = vand.u32 %v316, 4294901760
        %v1089 = vsub.f32 %v316, %v1088
        %v1090 = vand.u32 %v1089, 4294901760
        %1091 = vmatpush1.msra.mxu0 %v1090
        %1092 = vmatprep.subr.mxu0 0.0
        %1093 = vmatpush1.msra.mxu0 0.0
        %1094 = vmatprep.subr.mxu0 0.0
        %1095 = vmatpush1.msra.mxu0 0.0
        %1096 = vmatprep.subr.mxu0 0.0
        %1097 = vmatpush1.msra.mxu0 0.0
        %1098 = vmatprep.subr.mxu0 0.0
        %1099 = vmatpush1.msra.mxu0 0.0
        %1100 = vmatprep.subr.mxu0 0.0
        %1101 = vmatpush1.msra.mxu0 0.0
        %1102 = vmatprep.subr.mxu0 0.0
        %1103 = vmatpush1.msra.mxu0 0.0
        %1104 = vmatprep.subr.mxu0 0.0
        %1105 = vmatpush1.msra.mxu0 0.0
        %1106 = vmatprep.subr.mxu0 0.0
        %1107 = vmatpush1.msra.mxu0 0.0
        %1108 = vmatprep.subr.mxu0 0.0
        %1109 = vmatpush1.msra.mxu0 0.0
        %1110 = vmatprep.subr.mxu0 0.0
        %1111 = vmatpush1.msra.mxu0 0.0
        %1112 = vmatprep.subr.mxu0 0.0
        %1113 = vmatpush1.msra.mxu0 0.0
        %1114 = vmatprep.subr.mxu0 0.0
        %1115 = vmatpush1.msra.mxu0 0.0
        %1116 = vmatprep.subr.mxu0 0.0
        %1117 = vmatpush1.msra.mxu0 0.0
        %1118 = vmatprep.subr.mxu0 0.0
        %1119 = vmatpush1.msra.mxu0 0.0
        %1120 = vmatprep.subr.mxu0 0.0
        %1121 = vmatpush1.msra.mxu0 0.0
        %1122 = vmatprep.subr.mxu0 0.0
        %1123 = vmatpush1.msra.mxu0 0.0
        %1124 = vmatprep.subr.mxu0 0.0
        %1125 = vmatpush1.msra.mxu0 0.0
        %1126 = vmatprep.subr.mxu0 0.0
        %1127 = vmatpush1.msra.mxu0 0.0
        %1128 = vmatprep.subr.mxu0 0.0
        %1129 = vmatpush1.msra.mxu0 0.0
        %1130 = vmatprep.subr.mxu0 0.0
        %1131 = vmatpush1.msra.mxu0 0.0
        %1132 = vmatprep.subr.mxu0 0.0
        %1133 = vmatpush1.msra.mxu0 0.0
        %1134 = vmatprep.subr.mxu0 0.0
        %1135 = vmatpush1.msra.mxu0 0.0
        %1136 = vmatprep.subr.mxu0 0.0
        %1137 = vmatpush1.msra.mxu0 0.0
        %1138 = vmatprep.subr.mxu0 0.0
        %1139 = vmatpush1.msra.mxu0 0.0
        %1140 = vmatprep.subr.mxu0 0.0
        %1141 = vmatpush1.msra.mxu0 0.0
        %1142 = vmatprep.subr.mxu0 0.0
        %1143 = vmatpush1.msra.mxu0 0.0
        %1144 = vmatprep.subr.mxu0 0.0
        %1145 = vmatpush1.msra.mxu0 0.0
        %1146 = vmatprep.subr.mxu0 0.0
        %1147 = vmatpush1.msra.mxu0 0.0
        %1148 = vmatprep.subr.mxu0 0.0
        %1149 = vmatpush1.msra.mxu0 0.0
        %1150 = vmatprep.subr.mxu0 0.0
        %1151 = vmatpush1.msra.mxu0 0.0
        %1152 = vmatprep.subr.mxu0 0.0
        %1153 = vmatpush1.msra.mxu0 0.0
        %1154 = vmatprep.mubr.f32.mxu0 0.0
        %v1155 = vand.u32 %v785, 4294901760
        %1156 = vmatmul.mubr.f32.gmra.mrb[0].mxu0 %v1155
        %v1157 = vpop.f32.mrb[0].mxu0
        %v1158 = vadd.f32 %v1084, %v1157
        %v1159 = vpop.f32.mrb[0].mxu0
        %1160 = vdwg.mxu0
        %1161 = vmatprep.subr.mxu0 0.0
        %v1162 = vand.u32 %v316, 4294901760
        %1163 = vmatpush1.msra.mxu0 %v1162
        %1164 = vmatprep.subr.mxu0 0.0
        %1165 = vmatpush1.msra.mxu0 0.0
        %1166 = vmatprep.subr.mxu0 0.0
        %1167 = vmatpush1.msra.mxu0 0.0
        %1168 = vmatprep.subr.mxu0 0.0
        %1169 = vmatpush1.msra.mxu0 0.0
        %1170 = vmatprep.subr.mxu0 0.0
        %1171 = vmatpush1.msra.mxu0 0.0
        %1172 = vmatprep.subr.mxu0 0.0
        %1173 = vmatpush1.msra.mxu0 0.0
        %1174 = vmatprep.subr.mxu0 0.0
        %1175 = vmatpush1.msra.mxu0 0.0
        %1176 = vmatprep.subr.mxu0 0.0
        %1177 = vmatpush1.msra.mxu0 0.0
        %1178 = vmatprep.subr.mxu0 0.0
        %1179 = vmatpush1.msra.mxu0 0.0
        %1180 = vmatprep.subr.mxu0 0.0
        %1181 = vmatpush1.msra.mxu0 0.0
        %1182 = vmatprep.subr.mxu0 0.0
        %1183 = vmatpush1.msra.mxu0 0.0
        %1184 = vmatprep.subr.mxu0 0.0
        %1185 = vmatpush1.msra.mxu0 0.0
        %1186 = vmatprep.subr.mxu0 0.0
        %1187 = vmatpush1.msra.mxu0 0.0
        %1188 = vmatprep.subr.mxu0 0.0
        %1189 = vmatpush1.msra.mxu0 0.0
        %1190 = vmatprep.subr.mxu0 0.0
        %1191 = vmatpush1.msra.mxu0 0.0
        %1192 = vmatprep.subr.mxu0 0.0
        %1193 = vmatpush1.msra.mxu0 0.0
        %1194 = vmatprep.subr.mxu0 0.0
        %1195 = vmatpush1.msra.mxu0 0.0
        %1196 = vmatprep.subr.mxu0 0.0
        %1197 = vmatpush1.msra.mxu0 0.0
        %1198 = vmatprep.subr.mxu0 0.0
        %1199 = vmatpush1.msra.mxu0 0.0
        %1200 = vmatprep.subr.mxu0 0.0
        %1201 = vmatpush1.msra.mxu0 0.0
        %1202 = vmatprep.subr.mxu0 0.0
        %1203 = vmatpush1.msra.mxu0 0.0
        %1204 = vmatprep.subr.mxu0 0.0
        %1205 = vmatpush1.msra.mxu0 0.0
        %1206 = vmatprep.subr.mxu0 0.0
        %1207 = vmatpush1.msra.mxu0 0.0
        %1208 = vmatprep.subr.mxu0 0.0
        %1209 = vmatpush1.msra.mxu0 0.0
        %1210 = vmatprep.subr.mxu0 0.0
        %1211 = vmatpush1.msra.mxu0 0.0
        %1212 = vmatprep.subr.mxu0 0.0
        %1213 = vmatpush1.msra.mxu0 0.0
        %1214 = vmatprep.subr.mxu0 0.0
        %1215 = vmatpush1.msra.mxu0 0.0
        %1216 = vmatprep.subr.mxu0 0.0
        %1217 = vmatpush1.msra.mxu0 0.0
        %1218 = vmatprep.subr.mxu0 0.0
        %1219 = vmatpush1.msra.mxu0 0.0
        %1220 = vmatprep.subr.mxu0 0.0
        %1221 = vmatpush1.msra.mxu0 0.0
        %1222 = vmatprep.subr.mxu0 0.0
        %1223 = vmatpush1.msra.mxu0 0.0
        %1224 = vmatprep.subr.mxu0 0.0
        %1225 = vmatpush1.msra.mxu0 0.0
        %1226 = vmatprep.mubr.f32.mxu0 0.0
        %v1227 = vand.u32 %v785, 4294901760
        %1228 = vmatmul.mubr.f32.gmra.mrb[0].mxu0 %v1227
        %v1229 = vpop.f32.mrb[0].mxu0
        %v1230 = vadd.f32 %v1158, %v1229
        %v1231 = vpop.f32.mrb[0].mxu0
        %1232 = vdwg.mxu0
        %1233 = vst.msk [vmem:[%s313] sm:$0xff] %vm771, %v783
        %1234 = vst.msk [vmem:[%s306] sm:$0xff] %vm318, %v1230
        %s1235 = sand.u32 %s130, 1
        %s1236 = scalar_lea.sflag [#allocation4], %s1235
        %s1237 = sand.u32 %s130, 1
        %s1238 = smul.addr %s1237, 8
        %s1239 = scalar_lea.vmem [#allocation8], %s1238
        %s1240 = sand.u32 %s158, 1
        %s1241 = scalar_lea.sflag [#allocation10], %s1240
        %s1242 = sand.u32 %s158, 1
        %s1243 = smul.addr %s1242, 8
        %s1244 = scalar_lea.vmem [#allocation9], %s1243
        // Predicated region
        $region45: #{tpu_custom_call.1} parent=31 // pred_check
          %p1245 = pneg %p140
        $region46: #{tpu_custom_call.1} parent=31 // pred_check_branch
          %1247 = sbr.rel (%p1245) target = $region48
        $region47: #{tpu_custom_call.1} parent=31 // pred_region
          %s1249 = ssub.s32 128, 128
          %1250 = vsyncadd %s1236, %s1249
          %s1251 = sadd.s32 %s33, %s32
          %s1252 = smul.addr %s1251, 128
          %s1253 = scalar_lea.hbm %s3, %s1252
          %s1255 = sshll.u32 %s1239, 4
          %s1256 = int_to_ptr.vmem [resolvable:$true] %s1255
          %1258 = dma.vmem_to_hbm [thread:$0]  %s1256, 128, %s1253, %s1236
        $region48: #{tpu_custom_call.1} parent=31 // pred_fallthru
          _
        // Predicated region
        $region49: #{tpu_custom_call.1} parent=31 // pred_check
          %p1259 = pneg %p168
        $region50: #{tpu_custom_call.1} parent=31 // pred_check_branch
          %1261 = sbr.rel (%p1259) target = $region52
        $region51: #{tpu_custom_call.1} parent=31 // pred_region
          %s1263 = ssub.s32 128, 128
          %1264 = vsyncadd %s1241, %s1263
          %s1265 = sadd.s32 %s33, %s32
          %s1266 = smul.addr %s1265, 128
          %s1267 = scalar_lea.hbm %s4, %s1266
          %s1269 = sshll.u32 %s1244, 4
          %s1270 = int_to_ptr.vmem [resolvable:$true] %s1269
          %1272 = dma.vmem_to_hbm [thread:$0]  %s1270, 128, %s1267, %s1241
        $region52: #{tpu_custom_call.1} parent=31 // pred_fallthru
          _
      $region32: #{tpu_custom_call.1} parent=5 // pred_fallthru
        _
      %p1273 = scmp.le.s32.totalorder 2, %s23
      // Predicated region
      $region53: #{tpu_custom_call.1} parent=5 // pred_check
        %p1274 = pneg %p1273
      $region54: #{tpu_custom_call.1} parent=5 // pred_check_branch
        %1276 = sbr.rel (%p1274) target = $region56
      $region55: #{tpu_custom_call.1} parent=5 // pred_region
        %s1277 = ssub.s32 %s23, 2
        // Predicated region
        $region57: #{tpu_custom_call.1} parent=55 // pred_check
          %p1278 = pneg %p146
        $region58: #{tpu_custom_call.1} parent=55 // pred_check_branch
          %1280 = sbr.rel (%p1278) target = $region60
        $region59: #{tpu_custom_call.1} parent=55 // pred_region
          %s1281 = sand.u32 %s131, 1
          %s1282 = scalar_lea.sflag [#allocation4], %s1281
          %s1283 = sand.u32 %s131, 1
          %s1284 = smul.addr %s1283, 8
          %s1285 = scalar_lea.vmem [#allocation8], %s1284
          %1286 = dma.done %s1282, 128
        $region60: #{tpu_custom_call.1} parent=55 // pred_fallthru
          _
        // Predicated region
        $region61: #{tpu_custom_call.1} parent=55 // pred_check
          %p1287 = pneg %p174
        $region62: #{tpu_custom_call.1} parent=55 // pred_check_branch
          %1289 = sbr.rel (%p1287) target = $region64
        $region63: #{tpu_custom_call.1} parent=55 // pred_region
          %s1290 = sand.u32 %s159, 1
          %s1291 = scalar_lea.sflag [#allocation10], %s1290
          %s1292 = sand.u32 %s159, 1
          %s1293 = smul.addr %s1292, 8
          %s1294 = scalar_lea.vmem [#allocation9], %s1293
          %1295 = dma.done %s1291, 128
        $region64: #{tpu_custom_call.1} parent=55 // pred_fallthru
          _
      $region56: #{tpu_custom_call.1} parent=5 // pred_fallthru
        _
    $region6: #{tpu_custom_call.1} parent=1 // loop_footer
      %s27 = sadd.s32 1, %s23
    $region7: #{tpu_custom_call.1} parent=1 // loop_footer_branch
      %22 = sbr.rel target = $region3
    $region8: #{tpu_custom_call.1} parent=1 // loop_exit
      _
    %1296 = vsyncpa [#allocation3], 1
    %s1297 = scalar_lea.sflag [#allocation3], 1
    %1298 = vsyncpa %s1297, 1
    %1299 = vsyncpa [#allocation6], 1
    %s1300 = scalar_lea.sflag [#allocation6], 1
    %1301 = vsyncpa %s1300, 1
    %1302 = vsyncpa [#allocation4], 1
    %s1303 = scalar_lea.sflag [#allocation4], 1
    %1304 = vsyncpa %s1303, 1
    %1305 = vsyncpa [#allocation10], 1
    %s1306 = scalar_lea.sflag [#allocation10], 1
    %1307 = vsyncpa %s1306, 1

</llo_original>
